<compile_context>
chip_gen: v7x
topology: tpu7x:2x2x1
jax: 0.10.0
libtpu: 0.0.40
codegen_flags: <defaults>
</compile_context>

<pallas_src>
import functools

import jax
import jax.numpy as jnp
from jax.experimental import pallas as pl
from jax.experimental.pallas import tpu as pltpu


def _round_up(v, m):
    return -(-v // m) * m


def _pipeline_mode_supported():
    """True iff pl.BlockSpec accepts pipeline_mode=pl.Buffered(n)."""
    if not hasattr(pl, "Buffered"):
        return False
    try:
        pl.BlockSpec((8, 128), lambda i: (i, 0), pipeline_mode=pl.Buffered(1))
        return True
    except Exception:
        return False


_HAS_PIPELINE_MODE = _pipeline_mode_supported()


# ----------------------------------------------------------------------------
# Kernel: one batch tile through the whole encoder MLP.
# ----------------------------------------------------------------------------
def _encoder_mlp_kernel(n_layers, nonlinearity, compute_dtype, *refs):
    """refs = (x_ref, w0, b0, w1, b1, ..., w_{L-1}, b_{L-1}, out_ref)."""
    x_ref = refs[0]
    out_ref = refs[-1]

    # TODO(synk): nn.Dropout is identity in eval/inference mode; training-mode
    # dropout (random mask + 1/(1-p) scaling) is not reproduced here.
    h = x_ref[...].astype(compute_dtype)  # cast to bf16 in-kernel (no wrapper pass)

    for i in range(n_layers):
        w = refs[1 + 2 * i][...]          # [in_p, out_p], bf16
        b = refs[2 + 2 * i][...]          # [1, out_p], f32
        # bf16 x bf16 -> f32 accumulation on the MXU.
        acc = jnp.dot(h, w, preferred_element_type=jnp.float32) + b
        if i != n_layers - 1:             # last Linear has no nonlinearity
            if nonlinearity == "relu":
                acc = jnp.maximum(acc, 0.0)
            elif nonlinearity == "leaky-relu":
                acc = jnp.where(acc >= 0.0, acc, 0.01 * acc)
            # ' ' (NonlinRem) -> identity
            h = acc.astype(compute_dtype)  # back to bf16 for the next MXU matmul
        else:
            h = acc                        # keep f32 for the final store/cast

    out_ref[...] = h.astype(out_ref.dtype)


# ----------------------------------------------------------------------------
# One-time parameter preparation (hoisted out of the forward path).
# ----------------------------------------------------------------------------
def prepare_encoder_params(weights, biases, compute_dtype=jnp.bfloat16, lane=128):
    """Zero-pad hidden/output widths up to 128 lanes and cast to bf16 ONCE.

    weights[i]: [in_dim_i, out_dim_i] (transposed from PyTorch).  Zero padding
    of the extra columns/rows is mathematically exact for Linear+ReLU/
    LeakyReLU/identity chains.  The first layer's input width is left unpadded
    so x needs no lane padding at all.
    """
    in_dim = weights[0].shape[0]
    out_dims = [w.shape[1] for w in weights]
    out_dims_p = [_round_up(d, lane) for d in out_dims]

    padded_ws, padded_bs = [], []
    prev_in, prev_in_p = in_dim, in_dim  # first layer keeps native in_dim
    for w, b, d, dp in zip(weights, biases, out_dims, out_dims_p):
        wp = jnp.zeros((prev_in_p, dp), compute_dtype)
        wp = wp.at[:prev_in, :d].set(w.astype(compute_dtype))
        bp = jnp.zeros((1, dp), jnp.float32)
        bp = bp.at[:, :d].set(b.reshape(1, -1).astype(jnp.float32))
        padded_ws.append(wp)
        padded_bs.append(bp)
        prev_in, prev_in_p = d, dp

    return {
        "weights": padded_ws,
        "biases": padded_bs,
        "in_dim": in_dim,
        "code_dim": out_dims[-1],
        "code_dim_p": out_dims_p[-1],
        "compute_dtype": compute_dtype,
    }


# ----------------------------------------------------------------------------
# Forward wrapper
# ----------------------------------------------------------------------------
def aemlp_encoder_forward(x, params, nonlinearity="relu"):
    """x: [B, D, T] (freqlen, seqlen).  Returns [B, code_dim] in x.dtype.

    Implements the `selected_encoded_layers == -1` path of AEMLPNetEncoder.
    # TODO(synk): the `selected_encoded_layers=list` path (concatenation of
    # intermediate encoder activations) is not implemented here.
    """
    padded_ws = params["weights"]
    padded_bs = params["biases"]
    in_dim = params["in_dim"]
    code_dim = params["code_dim"]
    code_dim_p = params["code_dim_p"]
    compute_dtype = params["compute_dtype"]
    n_layers = len(padded_ws)

    B = x.shape[0]
    assert x.shape[1] * x.shape[2] == in_dim, (x.shape, in_dim)
    out_dtype = x.dtype

    x_itemsize = jnp.dtype(x.dtype).itemsize
    out_itemsize = jnp.dtype(out_dtype).itemsize
    cdt_itemsize = jnp.dtype(compute_dtype).itemsize

    # --- generation-aware VMEM budget (~72% of per-core VMEM) ---------------
    try:
        vmem_cap = int(pltpu.get_tpu_info().vmem_capacity_bytes)
    except Exception:
        vmem_cap = 64 * 1024 * 1024  # conservative fallback (v7x per-TC size)
    budget = int(vmem_cap * 0.72)    # 25-30% headroom for Mosaic scratch

    w_bytes = sum(a.nbytes for a in padded_ws) + sum(a.nbytes for a in padded_bs)
    # Single-buffered weights when pipeline_mode is available, else 2x.
    w_vmem = w_bytes * (1 if _HAS_PIPELINE_MODE else 2)

    max_width = max([in_dim] + [w.shape[1] for w in padded_ws])

    def _vmem_need(tb, n_io_buf=2):
        x_tile = n_io_buf * tb * in_dim * x_itemsize
        out_tile = n_io_buf * tb * code_dim_p * out_itemsize
        # in-kernel intermediates: live f32 accumulator + activation copies.
        interm = tb * max_width * (2 * 4 + 2 * cdt_itemsize)
        return w_vmem + x_tile + out_tile + interm

    # --- batch tile selection: biggest that fits, >=2 grid steps if possible -
    gran = 16 if cdt_itemsize == 2 else 8          # bf16 sublane packing
    max_tile = 2048 if vmem_cap >= (100 << 20) else 1024
    B_gran = _round_up(B, gran)
    tile_b = min(max_tile, B_gran)
    while tile_b > gran and _vmem_need(tile_b) > budget:
        tile_b = max(gran, _round_up(tile_b // 2, gran))
    # Keep at least 2 grid steps when the batch allows it (v7x has 2 TCs, and
    # >=2 steps lets the BlockSpec pipeline overlap DMA with compute).
    if B_gran >= 2 * gran:
        tile_b = min(tile_b, _round_up(-(-B_gran // 2), gran))

    B_p = _round_up(B, tile_b)
    num_tiles = B_p // tile_b

    # Deeper buffering of the activation tiles only if the grid stays long.
    io_buffers = 2
    if num_tiles >= 8 and _HAS_PIPELINE_MODE and _vmem_need(tile_b, 3) <= budget:
        io_buffers = 3

    # --- input prep: native dtype, no lane pad, minimal batch pad -----------
    x_flat = x.reshape(B, in_dim)
    if B_p != B:
        x_flat = jnp.pad(x_flat, ((0, B_p - B), (0, 0)))

    flops = 2 * B_p * sum(w.shape[0] * w.shape[1] for w in padded_ws)
    bytes_accessed = int(x_flat.nbytes + w_bytes + B_p * code_dim_p * out_itemsize)

    kernel = functools.partial(_encoder_mlp_kernel, n_layers, nonlinearity,
                               compute_dtype)
    args = [x_flat]
    for wp, bp in zip(padded_ws, padded_bs):
        args.append(wp)
        args.append(bp)

    def _run(use_pipeline_mode):
        def mk(shape, index_map, n_buf):
            if use_pipeline_mode:
                return pl.BlockSpec(shape, index_map,
                                    pipeline_mode=pl.Buffered(n_buf))
            return pl.BlockSpec(shape, index_map)

        in_specs = [mk((tile_b, in_dim), lambda i: (i, 0), io_buffers)]
        for wp, bp in zip(padded_ws, padded_bs):
            # grid-invariant weights/biases: resident in VMEM, single buffer.
            in_specs.append(mk(wp.shape, lambda i: (0, 0), 1))
            in_specs.append(mk(bp.shape, lambda i: (0, 0), 1))
        out_spec = mk((tile_b, code_dim_p), lambda i: (i, 0), io_buffers)

        return pl.pallas_call(
            kernel,
            out_shape=jax.ShapeDtypeStruct((B_p, code_dim_p), out_dtype),
            grid_spec=pltpu.PrefetchScalarGridSpec(
                num_scalar_prefetch=0,
                grid=(num_tiles,),
                in_specs=in_specs,
                out_specs=out_spec,
            ),
            compiler_params=pltpu.CompilerParams(
                dimension_semantics=("parallel",),
                vmem_limit_bytes=budget,
            ),
            cost_estimate=pl.CostEstimate(
                flops=flops, transcendentals=0, bytes_accessed=bytes_accessed),
        )(*args)

    if _HAS_PIPELINE_MODE:
        try:
            out_p = _run(True)
        except Exception:
            out_p = _run(False)   # safety net: default-buffered fallback
    else:
        out_p = _run(False)

    # Strip batch padding and lane padding of the code dimension.
    return out_p[:B, :code_dim]


# ----------------------------------------------------------------------------
# Deterministic parameter init (mirrors nn.Linear's U(-1/sqrt(in), 1/sqrt(in)))
# ----------------------------------------------------------------------------
def init_params(key, freqlen, seqlen, hidden_size, hidden_units):
    all_units = list(hidden_units) + [hidden_size]
    weights, biases = [], []
    in_dim = seqlen * freqlen
    for out_dim in all_units:
        key, kw, kb = jax.random.split(key, 3)
        bound = 1.0 / jnp.sqrt(in_dim)
        # stored as [in, out] (transposed from PyTorch's [out, in])
        w = jax.random.uniform(kw, (in_dim, out_dim), jnp.float32, -bound, bound)
        b = jax.random.uniform(kb, (out_dim,), jnp.float32, -bound, bound)
        weights.append(w)
        biases.append(b)
        in_dim = out_dim
    return weights, biases


# ----------------------------------------------------------------------------
# References for sanity checks
# ----------------------------------------------------------------------------
def reference_forward_bf16(x, weights, biases, nonlinearity="relu",
                           compute_dtype=jnp.bfloat16):
    """Same precision recipe as the kernel: bf16 matmuls, f32 accumulation."""
    B = x.shape[0]
    h = x.reshape(B, -1).astype(compute_dtype)
    for i, (w, b) in enumerate(zip(weights, biases)):
        acc = jnp.dot(h, w.astype(compute_dtype),
                      preferred_element_type=jnp.float32) + b.astype(jnp.float32)
        if i != len(weights) - 1:
            if nonlinearity == "relu":
                acc = jnp.maximum(acc, 0.0)
            elif nonlinearity == "leaky-relu":
                acc = jnp.where(acc >= 0.0, acc, 0.01 * acc)
            h = acc.astype(compute_dtype)
        else:
            h = acc
    return h.astype(x.dtype)


def reference_forward_f32(x, weights, biases, nonlinearity="relu"):
    B = x.shape[0]
    h = x.reshape(B, -1)
    for i, (w, b) in enumerate(zip(weights, biases)):
        h = h @ w + b
        if i != len(weights) - 1:
            if nonlinearity == "relu":
                h = jnp.maximum(h, 0.0)
            elif nonlinearity == "leaky-relu":
                h = jnp.where(h >= 0.0, h, 0.01 * h)
    return h


if __name__ == "__main__":
    # Small, module-consistent shapes.
    B, freqlen, seqlen = 2, 4, 8          # input [B, D, T] = [2, 4, 8]
    hidden_units = [32, 32]               # hidden linear layers
    hidden_size = 16                      # code_dim (latent size)
    nonlinearity = "relu"
    dropout_prob = 0.1                    # identity at inference

    key = jax.random.PRNGKey(0)
    key, kx = jax.random.split(key)
    x = jax.random.normal(kx, (B, freqlen, seqlen), jnp.float32)

    weights, biases = init_params(key, freqlen, seqlen, hidden_size, hidden_units)
    # Pad/cast the parameters ONCE; reused across every forward call.
    params = prepare_encoder_params(weights, biases)

    out = aemlp_encoder_forward(x, params, nonlinearity)
    out = jax.block_until_ready(out)
    assert out.shape == (B, hidden_size), out.shape

    ref_bf16 = reference_forward_bf16(x, weights, biases, nonlinearity)
    assert jnp.allclose(out, ref_bf16, atol=1e-3, rtol=1e-3), "mismatch vs bf16 reference"

    ref_f32 = reference_forward_f32(x, weights, biases, nonlinearity)
    assert jnp.allclose(out, ref_f32, atol=5e-2, rtol=5e-2), "mismatch vs f32 reference"

    # Second case: multi-tile grid (>=2 steps for megacore) + batch padding path.
    B2 = 300
    key, kx2 = jax.random.split(key)
    x2 = jax.random.normal(kx2, (B2, freqlen, seqlen), jnp.float32)
    out2 = jax.block_until_ready(
        aemlp_encoder_forward(x2, params, nonlinearity))
    assert out2.shape == (B2, hidden_size), out2.shape
    ref2 = reference_forward_bf16(x2, weights, biases, nonlinearity)
    assert jnp.allclose(out2, ref2, atol=1e-3, rtol=1e-3), "mismatch (tiled batch)"

    print("KERNEL_OK")
</pallas_src>

<mosaic_0001>
module attributes {stable_mosaic.version = 11 : i64} {
  func.func @_encoder_mlp_kernel(%arg0: i32, %arg1: memref<16x32xf32, #tpu.memory_space<vmem>>, %arg2: memref<32x128xbf16, #tpu.memory_space<vmem>>, %arg3: memref<1x128xf32, #tpu.memory_space<vmem>>, %arg4: memref<128x128xbf16, #tpu.memory_space<vmem>>, %arg5: memref<1x128xf32, #tpu.memory_space<vmem>>, %arg6: memref<128x128xbf16, #tpu.memory_space<vmem>>, %arg7: memref<1x128xf32, #tpu.memory_space<vmem>>, %arg8: memref<16x128xf32, #tpu.memory_space<vmem>>) attributes {dimension_semantics = [#tpu.dimension_semantics<parallel>], iteration_bounds = array<i64: 1>, scalar_prefetch = 0 : i64, scratch_operands = 0 : i64, tpu.core_type = #tpu.core_type<tc>, window_params = [{pipeline_mode = #tpu.pipeline_mode<double_buffered>, transform_indices = @transform_0, window_bounds = array<i64: 16, 32>}, {pipeline_mode = #tpu.pipeline_mode<synchronous>, transform_indices = @transform_1, window_bounds = array<i64: 32, 128>}, {pipeline_mode = #tpu.pipeline_mode<synchronous>, transform_indices = @transform_2, window_bounds = array<i64: 1, 128>}, {pipeline_mode = #tpu.pipeline_mode<synchronous>, transform_indices = @transform_3, window_bounds = array<i64: 128, 128>}, {pipeline_mode = #tpu.pipeline_mode<synchronous>, transform_indices = @transform_4, window_bounds = array<i64: 1, 128>}, {pipeline_mode = #tpu.pipeline_mode<synchronous>, transform_indices = @transform_5, window_bounds = array<i64: 128, 128>}, {pipeline_mode = #tpu.pipeline_mode<synchronous>, transform_indices = @transform_6, window_bounds = array<i64: 1, 128>}, {pipeline_mode = #tpu.pipeline_mode<double_buffered>, transform_indices = @transform_7, window_bounds = array<i64: 16, 128>}]} {
    %c0 = arith.constant 0 : index
    %c0_0 = arith.constant 0 : index
    %0 = vector.load %arg1[%c0, %c0_0] : memref<16x32xf32, #tpu.memory_space<vmem>>, vector<16x32xf32>
    %1 = arith.truncf %0 : vector<16x32xf32> to vector<16x32xbf16>
    %c0_1 = arith.constant 0 : index
    %c0_2 = arith.constant 0 : index
    %2 = vector.load %arg2[%c0_1, %c0_2] : memref<32x128xbf16, #tpu.memory_space<vmem>>, vector<32x128xbf16>
    %c0_3 = arith.constant 0 : index
    %c0_4 = arith.constant 0 : index
    %3 = vector.load %arg3[%c0_3, %c0_4] : memref<1x128xf32, #tpu.memory_space<vmem>>, vector<1x128xf32>
    %cst = arith.constant dense<0.000000e+00> : vector<16x128xf32>
    %4 = tpu.matmul %1, %2, %cst {dimension_numbers = #tpu.dot_dimension_numbers<[1], [0], [0], [1], [0, 0, 1, 1], [], []>} : vector<16x32xbf16>, vector<32x128xbf16>, vector<16x128xf32> -> vector<16x128xf32>
    %5 = vector.broadcast %3 : vector<1x128xf32> to vector<16x128xf32>
    %6 = arith.addf %4, %5 : vector<16x128xf32>
    %cst_5 = arith.constant 0.000000e+00 : f32
    %7 = vector.broadcast %cst_5 : f32 to vector<16x128xf32>
    %8 = arith.maximumf %6, %7 : vector<16x128xf32>
    %9 = arith.truncf %8 : vector<16x128xf32> to vector<16x128xbf16>
    %c0_6 = arith.constant 0 : index
    %c0_7 = arith.constant 0 : index
    %10 = vector.load %arg4[%c0_6, %c0_7] : memref<128x128xbf16, #tpu.memory_space<vmem>>, vector<128x128xbf16>
    %c0_8 = arith.constant 0 : index
    %c0_9 = arith.constant 0 : index
    %11 = vector.load %arg5[%c0_8, %c0_9] : memref<1x128xf32, #tpu.memory_space<vmem>>, vector<1x128xf32>
    %cst_10 = arith.constant dense<0.000000e+00> : vector<16x128xf32>
    %12 = tpu.matmul %9, %10, %cst_10 {dimension_numbers = #tpu.dot_dimension_numbers<[1], [0], [0], [1], [0, 0, 1, 1], [], []>} : vector<16x128xbf16>, vector<128x128xbf16>, vector<16x128xf32> -> vector<16x128xf32>
    %13 = vector.broadcast %11 : vector<1x128xf32> to vector<16x128xf32>
    %14 = arith.addf %12, %13 : vector<16x128xf32>
    %cst_11 = arith.constant 0.000000e+00 : f32
    %15 = vector.broadcast %cst_11 : f32 to vector<16x128xf32>
    %16 = arith.maximumf %14, %15 : vector<16x128xf32>
    %17 = arith.truncf %16 : vector<16x128xf32> to vector<16x128xbf16>
    %c0_12 = arith.constant 0 : index
    %c0_13 = arith.constant 0 : index
    %18 = vector.load %arg6[%c0_12, %c0_13] : memref<128x128xbf16, #tpu.memory_space<vmem>>, vector<128x128xbf16>
    %c0_14 = arith.constant 0 : index
    %c0_15 = arith.constant 0 : index
    %19 = vector.load %arg7[%c0_14, %c0_15] : memref<1x128xf32, #tpu.memory_space<vmem>>, vector<1x128xf32>
    %cst_16 = arith.constant dense<0.000000e+00> : vector<16x128xf32>
    %20 = tpu.matmul %17, %18, %cst_16 {dimension_numbers = #tpu.dot_dimension_numbers<[1], [0], [0], [1], [0, 0, 1, 1], [], []>} : vector<16x128xbf16>, vector<128x128xbf16>, vector<16x128xf32> -> vector<16x128xf32>
    %21 = vector.broadcast %19 : vector<1x128xf32> to vector<16x128xf32>
    %22 = arith.addf %20, %21 : vector<16x128xf32>
    %c0_17 = arith.constant 0 : index
    %c0_18 = arith.constant 0 : index
    %23 = vector.load %arg8[%c0_17, %c0_18] : memref<16x128xf32, #tpu.memory_space<vmem>>, vector<16x128xf32>
    tpu.vector_store %arg8[%c0_17, %c0_18], %22 {strides = array<i32>} : memref<16x128xf32, #tpu.memory_space<vmem>>, vector<16x128xf32>,
    return
  }
  func.func @transform_0(%arg0: i32) -> (i32, i32) {
    %c0_i32 = arith.constant 0 : i32
    %c0_i32_0 = arith.constant 0 : i32
    return %arg0, %c0_i32 : i32, i32
  }
  func.func @transform_1(%arg0: i32) -> (i32, i32) {
    %c0_i32 = arith.constant 0 : i32
    %c0_i32_0 = arith.constant 0 : i32
    %c0_i32_1 = arith.constant 0 : i32
    return %c0_i32, %c0_i32_0 : i32, i32
  }
  func.func @transform_2(%arg0: i32) -> (i32, i32) {
    %c0_i32 = arith.constant 0 : i32
    %c0_i32_0 = arith.constant 0 : i32
    %c0_i32_1 = arith.constant 0 : i32
    return %c0_i32, %c0_i32_0 : i32, i32
  }
  func.func @transform_3(%arg0: i32) -> (i32, i32) {
    %c0_i32 = arith.constant 0 : i32
    %c0_i32_0 = arith.constant 0 : i32
    %c0_i32_1 = arith.constant 0 : i32
    return %c0_i32, %c0_i32_0 : i32, i32
  }
  func.func @transform_4(%arg0: i32) -> (i32, i32) {
    %c0_i32 = arith.constant 0 : i32
    %c0_i32_0 = arith.constant 0 : i32
    %c0_i32_1 = arith.constant 0 : i32
    return %c0_i32, %c0_i32_0 : i32, i32
  }
  func.func @transform_5(%arg0: i32) -> (i32, i32) {
    %c0_i32 = arith.constant 0 : i32
    %c0_i32_0 = arith.constant 0 : i32
    %c0_i32_1 = arith.constant 0 : i32
    return %c0_i32, %c0_i32_0 : i32, i32
  }
  func.func @transform_6(%arg0: i32) -> (i32, i32) {
    %c0_i32 = arith.constant 0 : i32
    %c0_i32_0 = arith.constant 0 : i32
    %c0_i32_1 = arith.constant 0 : i32
    return %c0_i32, %c0_i32_0 : i32, i32
  }
  func.func @transform_7(%arg0: i32) -> (i32, i32) {
    %c0_i32 = arith.constant 0 : i32
    %c0_i32_0 = arith.constant 0 : i32
    return %arg0, %c0_i32 : i32, i32
  }
}

module attributes {stable_mosaic.version = 11 : i64} {
  func.func @_encoder_mlp_kernel(%arg0: i32, %arg1: memref<16x32xf32, #tpu.memory_space<vmem>>, %arg2: memref<32x128xbf16, #tpu.memory_space<vmem>>, %arg3: memref<1x128xf32, #tpu.memory_space<vmem>>, %arg4: memref<128x128xbf16, #tpu.memory_space<vmem>>, %arg5: memref<1x128xf32, #tpu.memory_space<vmem>>, %arg6: memref<128x128xbf16, #tpu.memory_space<vmem>>, %arg7: memref<1x128xf32, #tpu.memory_space<vmem>>, %arg8: memref<16x128xf32, #tpu.memory_space<vmem>>) attributes {dimension_semantics = [#tpu.dimension_semantics<parallel>], iteration_bounds = array<i64: 1>, scalar_prefetch = 0 : i64, scratch_operands = 0 : i64, tpu.core_type = #tpu.core_type<tc>, window_params = [{transform_indices = @transform_0, window_bounds = array<i64: 16, 32>}, {pipeline_mode = #tpu.pipeline_mode<synchronous>, transform_indices = @transform_1, window_bounds = array<i64: 32, 128>}, {pipeline_mode = #tpu.pipeline_mode<synchronous>, transform_indices = @transform_2, window_bounds = array<i64: 1, 128>}, {pipeline_mode = #tpu.pipeline_mode<synchronous>, transform_indices = @transform_3, window_bounds = array<i64: 128, 128>}, {pipeline_mode = #tpu.pipeline_mode<synchronous>, transform_indices = @transform_4, window_bounds = array<i64: 1, 128>}, {pipeline_mode = #tpu.pipeline_mode<synchronous>, transform_indices = @transform_5, window_bounds = array<i64: 128, 128>}, {pipeline_mode = #tpu.pipeline_mode<synchronous>, transform_indices = @transform_6, window_bounds = array<i64: 1, 128>}, {transform_indices = @transform_7, window_bounds = array<i64: 16, 128>}]} {
    %c0 = arith.constant 0 : index
    %c0_0 = arith.constant 0 : index
    %0 = vector.load %arg1[%c0, %c0_0] : memref<16x32xf32, #tpu.memory_space<vmem>>, vector<16x32xf32>
    %1 = arith.truncf %0 : vector<16x32xf32> to vector<16x32xbf16>
    %c0_1 = arith.constant 0 : index
    %c0_2 = arith.constant 0 : index
    %2 = vector.load %arg2[%c0_1, %c0_2] : memref<32x128xbf16, #tpu.memory_space<vmem>>, vector<32x128xbf16>
    %c0_3 = arith.constant 0 : index
    %c0_4 = arith.constant 0 : index
    %3 = vector.load %arg3[%c0_3, %c0_4] : memref<1x128xf32, #tpu.memory_space<vmem>>, vector<1x128xf32>
    %cst = arith.constant dense<0.000000e+00> : vector<16x128xf32>
    %4 = tpu.matmul %1, %2, %cst {dimension_numbers = #tpu.dot_dimension_numbers<[1], [0], [0], [1], [0, 0, 1, 1], [], []>} : vector<16x32xbf16>, vector<32x128xbf16>, vector<16x128xf32> -> vector<16x128xf32>
    %5 = vector.broadcast %3 : vector<1x128xf32> to vector<16x128xf32>
    %6 = arith.addf %4, %5 : vector<16x128xf32>
    %cst_5 = arith.constant 0.000000e+00 : f32
    %7 = vector.broadcast %cst_5 : f32 to vector<16x128xf32>
    %8 = arith.maximumf %6, %7 : vector<16x128xf32>
    %9 = arith.truncf %8 : vector<16x128xf32> to vector<16x128xbf16>
    %c0_6 = arith.constant 0 : index
    %c0_7 = arith.constant 0 : index
    %10 = vector.load %arg4[%c0_6, %c0_7] : memref<128x128xbf16, #tpu.memory_space<vmem>>, vector<128x128xbf16>
    %c0_8 = arith.constant 0 : index
    %c0_9 = arith.constant 0 : index
    %11 = vector.load %arg5[%c0_8, %c0_9] : memref<1x128xf32, #tpu.memory_space<vmem>>, vector<1x128xf32>
    %cst_10 = arith.constant dense<0.000000e+00> : vector<16x128xf32>
    %12 = tpu.matmul %9, %10, %cst_10 {dimension_numbers = #tpu.dot_dimension_numbers<[1], [0], [0], [1], [0, 0, 1, 1], [], []>} : vector<16x128xbf16>, vector<128x128xbf16>, vector<16x128xf32> -> vector<16x128xf32>
    %13 = vector.broadcast %11 : vector<1x128xf32> to vector<16x128xf32>
    %14 = arith.addf %12, %13 : vector<16x128xf32>
    %cst_11 = arith.constant 0.000000e+00 : f32
    %15 = vector.broadcast %cst_11 : f32 to vector<16x128xf32>
    %16 = arith.maximumf %14, %15 : vector<16x128xf32>
    %17 = arith.truncf %16 : vector<16x128xf32> to vector<16x128xbf16>
    %c0_12 = arith.constant 0 : index
    %c0_13 = arith.constant 0 : index
    %18 = vector.load %arg6[%c0_12, %c0_13] : memref<128x128xbf16, #tpu.memory_space<vmem>>, vector<128x128xbf16>
    %c0_14 = arith.constant 0 : index
    %c0_15 = arith.constant 0 : index
    %19 = vector.load %arg7[%c0_14, %c0_15] : memref<1x128xf32, #tpu.memory_space<vmem>>, vector<1x128xf32>
    %cst_16 = arith.constant dense<0.000000e+00> : vector<16x128xf32>
    %20 = tpu.matmul %17, %18, %cst_16 {dimension_numbers = #tpu.dot_dimension_numbers<[1], [0], [0], [1], [0, 0, 1, 1], [], []>} : vector<16x128xbf16>, vector<128x128xbf16>, vector<16x128xf32> -> vector<16x128xf32>
    %21 = vector.broadcast %19 : vector<1x128xf32> to vector<16x128xf32>
    %22 = arith.addf %20, %21 : vector<16x128xf32>
    %c0_17 = arith.constant 0 : index
    %c0_18 = arith.constant 0 : index
    %23 = vector.load %arg8[%c0_17, %c0_18] : memref<16x128xf32, #tpu.memory_space<vmem>>, vector<16x128xf32>
    tpu.vector_store %arg8[%c0_17, %c0_18], %22 {strides = array<i32>} : memref<16x128xf32, #tpu.memory_space<vmem>>, vector<16x128xf32>,
    return
  }
  func.func @transform_0(%arg0: i32) -> (i32, i32) {
    %c0_i32 = arith.constant 0 : i32
    %c0_i32_0 = arith.constant 0 : i32
    return %arg0, %c0_i32 : i32, i32
  }
  func.func @transform_1(%arg0: i32) -> (i32, i32) {
    %c0_i32 = arith.constant 0 : i32
    %c0_i32_0 = arith.constant 0 : i32
    %c0_i32_1 = arith.constant 0 : i32
    return %c0_i32, %c0_i32_0 : i32, i32
  }
  func.func @transform_2(%arg0: i32) -> (i32, i32) {
    %c0_i32 = arith.constant 0 : i32
    %c0_i32_0 = arith.constant 0 : i32
    %c0_i32_1 = arith.constant 0 : i32
    return %c0_i32, %c0_i32_0 : i32, i32
  }
  func.func @transform_3(%arg0: i32) -> (i32, i32) {
    %c0_i32 = arith.constant 0 : i32
    %c0_i32_0 = arith.constant 0 : i32
    %c0_i32_1 = arith.constant 0 : i32
    return %c0_i32, %c0_i32_0 : i32, i32
  }
  func.func @transform_4(%arg0: i32) -> (i32, i32) {
    %c0_i32 = arith.constant 0 : i32
    %c0_i32_0 = arith.constant 0 : i32
    %c0_i32_1 = arith.constant 0 : i32
    return %c0_i32, %c0_i32_0 : i32, i32
  }
  func.func @transform_5(%arg0: i32) -> (i32, i32) {
    %c0_i32 = arith.constant 0 : i32
    %c0_i32_0 = arith.constant 0 : i32
    %c0_i32_1 = arith.constant 0 : i32
    return %c0_i32, %c0_i32_0 : i32, i32
  }
  func.func @transform_6(%arg0: i32) -> (i32, i32) {
    %c0_i32 = arith.constant 0 : i32
    %c0_i32_0 = arith.constant 0 : i32
    %c0_i32_1 = arith.constant 0 : i32
    return %c0_i32, %c0_i32_0 : i32, i32
  }
  func.func @transform_7(%arg0: i32) -> (i32, i32) {
    %c0_i32 = arith.constant 0 : i32
    %c0_i32_0 = arith.constant 0 : i32
    return %arg0, %c0_i32 : i32, i32
  }
}

</mosaic_0001>

<llo_original>
// kernel: tpu_custom_call.1
$region0: #{tpu_custom_call.1}
  #allocation0 [shape = 'u32[]', space=smem, size = 0x4, offset = 0x4, fixed_abs, tag = 'smem constant byte address 0x4 - core index']
  #allocation1 [shape = 'u32[144,128]{1,0:T(1,128)}', space=vmem, size = 0x12000, scoped, tag = 'internal scratch']
  %s0 = inlined_call_operand.hbm [shape: f32[16,32], index: 0, kind: input, shape index: {}]
  %s1 = inlined_call_operand.hbm [shape: bf16[32,128], index: 1, kind: input, shape index: {}]
  %s2 = inlined_call_operand.vmem [shape: f32[1,128], index: 2, kind: input, shape index: {}]
  %s3 = inlined_call_operand.hbm [shape: bf16[128,128], index: 3, kind: input, shape index: {}]
  %s4 = inlined_call_operand.vmem [shape: f32[1,128], index: 4, kind: input, shape index: {}]
  %s5 = inlined_call_operand.hbm [shape: bf16[128,128], index: 5, kind: input, shape index: {}]
  %s6 = inlined_call_operand.vmem [shape: f32[1,128], index: 6, kind: input, shape index: {}]
  %s7 = inlined_call_operand.hbm [shape: f32[16,128], index: 7, kind: output, shape index: {}]
  %s8 = sld [smem:[#allocation0]]
  $region54: #{tpu_custom_call.1} parent=0
    _
  %s10 = ssub.s32 1, %s8
  %s11 = scalar_select 0, %s10, %s8
  $region1: #{tpu_custom_call.1} parent=0
    #allocation2 [shape = 'u8[8192]{0}', space=vmem, size = 0x2000, scoped, tag = 'input window, operand 0, single buffered']
    #allocation3 [shape = 's32[1]{0}', space=sflag, size = 0x4, scoped, tag = 'scoped memory for tpu_custom_call.1']
    #allocation4 [shape = 's32[1]{0}', space=sflag, size = 0x4, scoped, tag = 'scoped memory for tpu_custom_call.1']
    #allocation5 [shape = 'u8[8192]{0}', space=vmem, size = 0x2000, scoped, tag = 'input window, operand 1, single buffered']
    #allocation6 [shape = 's32[1]{0}', space=sflag, size = 0x4, scoped, tag = 'scoped memory for tpu_custom_call.1']
    #allocation7 [shape = 'u8[32768]{0}', space=vmem, size = 0x8000, scoped, tag = 'input window, operand 3, single buffered']
    #allocation8 [shape = 'u8[32768]{0}', space=vmem, size = 0x8000, scoped, tag = 'input window, operand 5, single buffered']
    #allocation9 [shape = 's32[1]{0}', space=sflag, size = 0x4, scoped, tag = 'scoped memory for tpu_custom_call.1']
    #allocation10 [shape = 'u8[8192]{0}', space=vmem, size = 0x2000, scoped, tag = 'output window, operand 0, single buffered']
    %12 = vsyncpa [#allocation3], 0
    %13 = vsyncpa [#allocation6], 0
    %14 = vsyncpa [#allocation9], 0
    %15 = vsyncpa [#allocation4], 0
    // Predicated region
    $region2: #{tpu_custom_call.1} parent=1 // pred_check
      _
    $region3: #{tpu_custom_call.1} parent=1 // pred_check_branch
      %17 = sbr.rel (0) target = $region5
    $region4: #{tpu_custom_call.1} parent=1 // pred_region
      %s19 = ssub.s32 256, 256
      %20 = vsyncadd [#allocation3], %s19
      %s21 = sshll.u32 [#allocation2], 4
      %s22 = int_to_ptr.vmem [resolvable:$true] %s21
      %27 = dma.hbm_to_vmem [thread:$0]  %s0, 256, %s22, [#allocation3], 128, 128, 8
    $region5: #{tpu_custom_call.1} parent=1 // pred_fallthru
      _
    // Predicated region
    $region6: #{tpu_custom_call.1} parent=1 // pred_check
      _
    $region7: #{tpu_custom_call.1} parent=1 // pred_check_branch
      %29 = sbr.rel (0) target = $region9
    $region8: #{tpu_custom_call.1} parent=1 // pred_region
      %s31 = ssub.s32 256, 256
      %32 = vsyncadd [#allocation6], %s31
      %s33 = sshll.u32 [#allocation5], 4
      %s34 = int_to_ptr.vmem [resolvable:$true] %s33
      %39 = dma.hbm_to_vmem [thread:$0]  %s1, 256, %s34, [#allocation6], 64, 64, 4
    $region9: #{tpu_custom_call.1} parent=1 // pred_fallthru
      _
    // Predicated region
    $region10: #{tpu_custom_call.1} parent=1 // pred_check
      _
    $region11: #{tpu_custom_call.1} parent=1 // pred_check_branch
      %41 = sbr.rel (0) target = $region13
    $region12: #{tpu_custom_call.1} parent=1 // pred_region
      _
    $region13: #{tpu_custom_call.1} parent=1 // pred_fallthru
      _
    // Predicated region
    $region14: #{tpu_custom_call.1} parent=1 // pred_check
      _
    $region15: #{tpu_custom_call.1} parent=1 // pred_check_branch
      %43 = sbr.rel (0) target = $region17
    $region16: #{tpu_custom_call.1} parent=1 // pred_region
      %s45 = ssub.s32 1024, 1024
      %46 = vsyncadd [#allocation6], %s45
      %s47 = sshll.u32 [#allocation7], 4
      %s48 = int_to_ptr.vmem [resolvable:$true] %s47
      %53 = dma.hbm_to_vmem [thread:$0]  %s3, 1024, %s48, [#allocation6], 64, 64, 4
    $region17: #{tpu_custom_call.1} parent=1 // pred_fallthru
      _
    // Predicated region
    $region18: #{tpu_custom_call.1} parent=1 // pred_check
      _
    $region19: #{tpu_custom_call.1} parent=1 // pred_check_branch
      %55 = sbr.rel (0) target = $region21
    $region20: #{tpu_custom_call.1} parent=1 // pred_region
      _
    $region21: #{tpu_custom_call.1} parent=1 // pred_fallthru
      _
    // Predicated region
    $region22: #{tpu_custom_call.1} parent=1 // pred_check
      _
    $region23: #{tpu_custom_call.1} parent=1 // pred_check_branch
      %57 = sbr.rel (0) target = $region25
    $region24: #{tpu_custom_call.1} parent=1 // pred_region
      %s59 = ssub.s32 1024, 1024
      %60 = vsyncadd [#allocation9], %s59
      %s61 = sshll.u32 [#allocation8], 4
      %s62 = int_to_ptr.vmem [resolvable:$true] %s61
      %67 = dma.hbm_to_vmem [thread:$0]  %s5, 1024, %s62, [#allocation9], 64, 64, 4
    $region25: #{tpu_custom_call.1} parent=1 // pred_fallthru
      _
    // Predicated region
    $region26: #{tpu_custom_call.1} parent=1 // pred_check
      _
    $region27: #{tpu_custom_call.1} parent=1 // pred_check_branch
      %69 = sbr.rel (0) target = $region29
    $region28: #{tpu_custom_call.1} parent=1 // pred_region
      _
    $region29: #{tpu_custom_call.1} parent=1 // pred_fallthru
      _
    // Predicated region
    $region30: #{tpu_custom_call.1} parent=1 // pred_check
      _
    $region31: #{tpu_custom_call.1} parent=1 // pred_check_branch
      %71 = sbr.rel (0) target = $region33
    $region32: #{tpu_custom_call.1} parent=1 // pred_region
      %72 = dma.done [#allocation3], 256
    $region33: #{tpu_custom_call.1} parent=1 // pred_fallthru
      _
    // Predicated region
    $region34: #{tpu_custom_call.1} parent=1 // pred_check
      _
    $region35: #{tpu_custom_call.1} parent=1 // pred_check_branch
      %74 = sbr.rel (0) target = $region37
    $region36: #{tpu_custom_call.1} parent=1 // pred_region
      %75 = dma.done [#allocation6], 256
    $region37: #{tpu_custom_call.1} parent=1 // pred_fallthru
      _
    // Predicated region
    $region38: #{tpu_custom_call.1} parent=1 // pred_check
      _
    $region39: #{tpu_custom_call.1} parent=1 // pred_check_branch
      %77 = sbr.rel (0) target = $region41
    $region40: #{tpu_custom_call.1} parent=1 // pred_region
      %78 = dma.done [#allocation6], 1024
    $region41: #{tpu_custom_call.1} parent=1 // pred_fallthru
      _
    // Predicated region
    $region42: #{tpu_custom_call.1} parent=1 // pred_check
      _
    $region43: #{tpu_custom_call.1} parent=1 // pred_check_branch
      %80 = sbr.rel (0) target = $region45
    $region44: #{tpu_custom_call.1} parent=1 // pred_region
      %81 = dma.done [#allocation9], 1024
    $region45: #{tpu_custom_call.1} parent=1 // pred_fallthru
      _
    %v83 = vld [vmem:[#allocation2] sm:$0xff]
    %v84 = vld [vmem:[#allocation2 + $0x8] sm:$0xff]
    %v85 = vpack.c.bf16 %v84, %v83
    %v86 = vld [vmem:[#allocation5] sm:$0xf]
    %v87 = vld [vmem:[#allocation5 + $0x4] sm:$0xf]
    %v88 = vld [vmem:[#allocation5 + $0x8] sm:$0xf]
    %v89 = vld [vmem:[#allocation5 + $0xc] sm:$0xf]
    %v90 = vld [vmem:[%s2] sm:$0x1]
    %v92 = vlaneseq
    %v93 = vshrl.u32 %v92, 7
    %v94 = vsub.s32 0, %v93
    %v95 = vrot.slane %v90, %v94
    %v101 = vunpack.c.l.b16 %v86
    %v102 = vunpack.c.l.b16 %v87
    %v103 = vunpack.c.l.b16 %v88
    %v104 = vunpack.c.l.b16 %v89
    %v105 = vpack.c.b16 %v102, %v101
    %v106 = vpack.c.b16 %v104, %v103
    %vm109 = vcmask 261120
    %v111 = vsel %vm109, %v85, 0
    %113 = vmatprep.subr.bf16.mxu0 0
    %114 = vmatpush1.bf16.msra.mxu0 %v105
    %115 = vmatprep.subr.bf16.mxu0 0
    %116 = vmatpush1.bf16.msra.mxu0 %v106
    %117 = vmatprep.subr.bf16.mxu0 0
    %118 = vmatpush1.bf16.msra.mxu0 0
    %119 = vmatprep.subr.bf16.mxu0 0
    %120 = vmatpush1.bf16.msra.mxu0 0
    %121 = vmatprep.subr.bf16.mxu0 0
    %122 = vmatpush1.bf16.msra.mxu0 0
    %123 = vmatprep.subr.bf16.mxu0 0
    %124 = vmatpush1.bf16.msra.mxu0 0
    %125 = vmatprep.subr.bf16.mxu0 0
    %126 = vmatpush1.bf16.msra.mxu0 0
    %127 = vmatprep.subr.bf16.mxu0 0
    %128 = vmatpush1.bf16.msra.mxu0 0
    %129 = vmatprep.subr.bf16.mxu0 0
    %130 = vmatpush1.bf16.msra.mxu0 0
    %131 = vmatprep.subr.bf16.mxu0 0
    %132 = vmatpush1.bf16.msra.mxu0 0
    %133 = vmatprep.subr.bf16.mxu0 0
    %134 = vmatpush1.bf16.msra.mxu0 0
    %135 = vmatprep.subr.bf16.mxu0 0
    %136 = vmatpush1.bf16.msra.mxu0 0
    %137 = vmatprep.subr.bf16.mxu0 0
    %138 = vmatpush1.bf16.msra.mxu0 0
    %139 = vmatprep.subr.bf16.mxu0 0
    %140 = vmatpush1.bf16.msra.mxu0 0
    %141 = vmatprep.subr.bf16.mxu0 0
    %142 = vmatpush1.bf16.msra.mxu0 0
    %143 = vmatprep.subr.bf16.mxu0 0
    %144 = vmatpush1.bf16.msra.mxu0 0
    %145 = vmatprep.mubr.bf16.mxu0 0
    %146 = vmatmul.mubr.bf16.gmra.mrb[0].mxu0 %v111
    %v147 = vpop.f32.mrb[0].mxu0
    %v148 = vadd.f32 %v95, %v147
    %v149 = vpop.f32.mrb[0].mxu0
    %v150 = vpop.f32.mrb[0].mxu0
    %v151 = vadd.f32 %v95, %v150
    %v152 = vpop.f32.mrb[0].mxu0
    %153 = vdwg.mxu0
    %v154 = vmax.f32 %v148, 0.0
    %v155 = vmax.f32 %v151, 0.0
    %v156 = vpack.c.bf16 %v155, %v154
    %v157 = vld [vmem:[#allocation7] sm:$0xf]
    %v158 = vld [vmem:[#allocation7 + $0x4] sm:$0xf]
    %v159 = vld [vmem:[#allocation7 + $0x8] sm:$0xf]
    %v160 = vld [vmem:[#allocation7 + $0xc] sm:$0xf]
    %v161 = vld [vmem:[#allocation7 + $0x10] sm:$0xf]
    %v162 = vld [vmem:[#allocation7 + $0x14] sm:$0xf]
    %v163 = vld [vmem:[#allocation7 + $0x18] sm:$0xf]
    %v164 = vld [vmem:[#allocation7 + $0x1c] sm:$0xf]
    %v165 = vld [vmem:[#allocation7 + $0x20] sm:$0xf]
    %v166 = vld [vmem:[#allocation7 + $0x24] sm:$0xf]
    %v167 = vld [vmem:[#allocation7 + $0x28] sm:$0xf]
    %v168 = vld [vmem:[#allocation7 + $0x2c] sm:$0xf]
    %v169 = vld [vmem:[#allocation7 + $0x30] sm:$0xf]
    %v170 = vld [vmem:[#allocation7 + $0x34] sm:$0xf]
    %v171 = vld [vmem:[#allocation7 + $0x38] sm:$0xf]
    %v172 = vld [vmem:[#allocation7 + $0x3c] sm:$0xf]
    %v173 = vld [vmem:[%s4] sm:$0x1]
    %v175 = vlaneseq
    %v176 = vshrl.u32 %v175, 7
    %v177 = vsub.s32 0, %v176
    %v178 = vrot.slane %v173, %v177
    %v196 = vunpack.c.l.b16 %v157
    %v197 = vunpack.c.l.b16 %v158
    %v198 = vunpack.c.l.b16 %v159
    %v199 = vunpack.c.l.b16 %v160
    %v200 = vunpack.c.l.b16 %v161
    %v201 = vunpack.c.l.b16 %v162
    %v202 = vunpack.c.l.b16 %v163
    %v203 = vunpack.c.l.b16 %v164
    %v204 = vunpack.c.l.b16 %v165
    %v205 = vunpack.c.l.b16 %v166
    %v206 = vunpack.c.l.b16 %v167
    %v207 = vunpack.c.l.b16 %v168
    %v208 = vunpack.c.l.b16 %v169
    %v209 = vunpack.c.l.b16 %v170
    %v210 = vunpack.c.l.b16 %v171
    %v211 = vunpack.c.l.b16 %v172
    %v212 = vpack.c.b16 %v197, %v196
    %v213 = vpack.c.b16 %v199, %v198
    %v214 = vpack.c.b16 %v201, %v200
    %v215 = vpack.c.b16 %v203, %v202
    %v216 = vpack.c.b16 %v205, %v204
    %v217 = vpack.c.b16 %v207, %v206
    %v218 = vpack.c.b16 %v209, %v208
    %v219 = vpack.c.b16 %v211, %v210
    %228 = vmatprep.subr.bf16.mxu0 0
    %229 = vmatpush1.bf16.msra.mxu0 %v212
    %230 = vmatprep.subr.bf16.mxu0 0
    %231 = vmatpush1.bf16.msra.mxu0 %v213
    %232 = vmatprep.subr.bf16.mxu0 0
    %233 = vmatpush1.bf16.msra.mxu0 %v214
    %234 = vmatprep.subr.bf16.mxu0 0
    %235 = vmatpush1.bf16.msra.mxu0 %v215
    %236 = vmatprep.subr.bf16.mxu0 0
    %237 = vmatpush1.bf16.msra.mxu0 %v216
    %238 = vmatprep.subr.bf16.mxu0 0
    %239 = vmatpush1.bf16.msra.mxu0 %v217
    %240 = vmatprep.subr.bf16.mxu0 0
    %241 = vmatpush1.bf16.msra.mxu0 %v218
    %242 = vmatprep.subr.bf16.mxu0 0
    %243 = vmatpush1.bf16.msra.mxu0 %v219
    %244 = vmatprep.subr.bf16.mxu0 0
    %245 = vmatpush1.bf16.msra.mxu0 0
    %246 = vmatprep.subr.bf16.mxu0 0
    %247 = vmatpush1.bf16.msra.mxu0 0
    %248 = vmatprep.subr.bf16.mxu0 0
    %249 = vmatpush1.bf16.msra.mxu0 0
    %250 = vmatprep.subr.bf16.mxu0 0
    %251 = vmatpush1.bf16.msra.mxu0 0
    %252 = vmatprep.subr.bf16.mxu0 0
    %253 = vmatpush1.bf16.msra.mxu0 0
    %254 = vmatprep.subr.bf16.mxu0 0
    %255 = vmatpush1.bf16.msra.mxu0 0
    %256 = vmatprep.subr.bf16.mxu0 0
    %257 = vmatpush1.bf16.msra.mxu0 0
    %258 = vmatprep.subr.bf16.mxu0 0
    %259 = vmatpush1.bf16.msra.mxu0 0
    %260 = vmatprep.mubr.bf16.mxu0 0
    %261 = vmatmul.mubr.bf16.gmra.mrb[0].mxu0 %v156
    %v262 = vpop.f32.mrb[0].mxu0
    %v263 = vadd.f32 %v178, %v262
    %v264 = vpop.f32.mrb[0].mxu0
    %v265 = vpop.f32.mrb[0].mxu0
    %v266 = vadd.f32 %v178, %v265
    %v267 = vpop.f32.mrb[0].mxu0
    %268 = vdwg.mxu0
    %v269 = vmax.f32 %v263, 0.0
    %v270 = vmax.f32 %v266, 0.0
    %v271 = vpack.c.bf16 %v270, %v269
    %v272 = vld [vmem:[#allocation8] sm:$0xf]
    %v273 = vld [vmem:[#allocation8 + $0x4] sm:$0xf]
    %v274 = vld [vmem:[#allocation8 + $0x8] sm:$0xf]
    %v275 = vld [vmem:[#allocation8 + $0xc] sm:$0xf]
    %v276 = vld [vmem:[#allocation8 + $0x10] sm:$0xf]
    %v277 = vld [vmem:[#allocation8 + $0x14] sm:$0xf]
    %v278 = vld [vmem:[#allocation8 + $0x18] sm:$0xf]
    %v279 = vld [vmem:[#allocation8 + $0x1c] sm:$0xf]
    %v280 = vld [vmem:[#allocation8 + $0x20] sm:$0xf]
    %v281 = vld [vmem:[#allocation8 + $0x24] sm:$0xf]
    %v282 = vld [vmem:[#allocation8 + $0x28] sm:$0xf]
    %v283 = vld [vmem:[#allocation8 + $0x2c] sm:$0xf]
    %v284 = vld [vmem:[#allocation8 + $0x30] sm:$0xf]
    %v285 = vld [vmem:[#allocation8 + $0x34] sm:$0xf]
    %v286 = vld [vmem:[#allocation8 + $0x38] sm:$0xf]
    %v287 = vld [vmem:[#allocation8 + $0x3c] sm:$0xf]
    %v288 = vld [vmem:[%s6] sm:$0x1]
    %v290 = vlaneseq
    %v291 = vshrl.u32 %v290, 7
    %v292 = vsub.s32 0, %v291
    %v293 = vrot.slane %v288, %v292
    %v311 = vunpack.c.l.b16 %v272
    %v312 = vunpack.c.l.b16 %v273
    %v313 = vunpack.c.l.b16 %v274
    %v314 = vunpack.c.l.b16 %v275
    %v315 = vunpack.c.l.b16 %v276
    %v316 = vunpack.c.l.b16 %v277
    %v317 = vunpack.c.l.b16 %v278
    %v318 = vunpack.c.l.b16 %v279
    %v319 = vunpack.c.l.b16 %v280
    %v320 = vunpack.c.l.b16 %v281
    %v321 = vunpack.c.l.b16 %v282
    %v322 = vunpack.c.l.b16 %v283
    %v323 = vunpack.c.l.b16 %v284
    %v324 = vunpack.c.l.b16 %v285
    %v325 = vunpack.c.l.b16 %v286
    %v326 = vunpack.c.l.b16 %v287
    %v327 = vpack.c.b16 %v312, %v311
    %v328 = vpack.c.b16 %v314, %v313
    %v329 = vpack.c.b16 %v316, %v315
    %v330 = vpack.c.b16 %v318, %v317
    %v331 = vpack.c.b16 %v320, %v319
    %v332 = vpack.c.b16 %v322, %v321
    %v333 = vpack.c.b16 %v324, %v323
    %v334 = vpack.c.b16 %v326, %v325
    %343 = vmatprep.subr.bf16.mxu0 0
    %344 = vmatpush1.bf16.msra.mxu0 %v327
    %345 = vmatprep.subr.bf16.mxu0 0
    %346 = vmatpush1.bf16.msra.mxu0 %v328
    %347 = vmatprep.subr.bf16.mxu0 0
    %348 = vmatpush1.bf16.msra.mxu0 %v329
    %349 = vmatprep.subr.bf16.mxu0 0
    %350 = vmatpush1.bf16.msra.mxu0 %v330
    %351 = vmatprep.subr.bf16.mxu0 0
    %352 = vmatpush1.bf16.msra.mxu0 %v331
    %353 = vmatprep.subr.bf16.mxu0 0
    %354 = vmatpush1.bf16.msra.mxu0 %v332
    %355 = vmatprep.subr.bf16.mxu0 0
    %356 = vmatpush1.bf16.msra.mxu0 %v333
    %357 = vmatprep.subr.bf16.mxu0 0
    %358 = vmatpush1.bf16.msra.mxu0 %v334
    %359 = vmatprep.subr.bf16.mxu0 0
    %360 = vmatpush1.bf16.msra.mxu0 0
    %361 = vmatprep.subr.bf16.mxu0 0
    %362 = vmatpush1.bf16.msra.mxu0 0
    %363 = vmatprep.subr.bf16.mxu0 0
    %364 = vmatpush1.bf16.msra.mxu0 0
    %365 = vmatprep.subr.bf16.mxu0 0
    %366 = vmatpush1.bf16.msra.mxu0 0
    %367 = vmatprep.subr.bf16.mxu0 0
    %368 = vmatpush1.bf16.msra.mxu0 0
    %369 = vmatprep.subr.bf16.mxu0 0
    %370 = vmatpush1.bf16.msra.mxu0 0
    %371 = vmatprep.subr.bf16.mxu0 0
    %372 = vmatpush1.bf16.msra.mxu0 0
    %373 = vmatprep.subr.bf16.mxu0 0
    %374 = vmatpush1.bf16.msra.mxu0 0
    %375 = vmatprep.mubr.bf16.mxu0 0
    %376 = vmatmul.mubr.bf16.gmra.mrb[0].mxu0 %v271
    %v377 = vpop.f32.mrb[0].mxu0
    %v378 = vadd.f32 %v293, %v377
    %v379 = vpop.f32.mrb[0].mxu0
    %v380 = vpop.f32.mrb[0].mxu0
    %v381 = vadd.f32 %v293, %v380
    %v382 = vpop.f32.mrb[0].mxu0
    %383 = vdwg.mxu0
    %384 = vst [vmem:[#allocation10] sm:$0xff] %v378
    %385 = vst [vmem:[#allocation10 + $0x8] sm:$0xff] %v381
    // Predicated region
    $region46: #{tpu_custom_call.1} parent=1 // pred_check
      _
    $region47: #{tpu_custom_call.1} parent=1 // pred_check_branch
      %387 = sbr.rel (0) target = $region49
    $region48: #{tpu_custom_call.1} parent=1 // pred_region
      %s389 = ssub.s32 256, 256
      %390 = vsyncadd [#allocation4], %s389
      %s391 = sshll.u32 [#allocation10], 4
      %s392 = int_to_ptr.vmem [resolvable:$true] %s391
      %397 = dma.vmem_to_hbm [thread:$0]  %s392, 256, %s7, [#allocation4], 128, 128, 8
    $region49: #{tpu_custom_call.1} parent=1 // pred_fallthru
      _
    // Predicated region
    $region50: #{tpu_custom_call.1} parent=1 // pred_check
      _
    $region51: #{tpu_custom_call.1} parent=1 // pred_check_branch
      %399 = sbr.rel (0) target = $region53
    $region52: #{tpu_custom_call.1} parent=1 // pred_region
      %400 = dma.done [#allocation4], 256
    $region53: #{tpu_custom_call.1} parent=1 // pred_fallthru
      _
    %401 = vsyncpa [#allocation3], 1
    %402 = vsyncpa [#allocation6], 1
    %403 = vsyncpa [#allocation9], 1
    %404 = vsyncpa [#allocation4], 1

// kernel: tpu_custom_call.1
$region0: #{tpu_custom_call.1}
  #allocation0 [shape = 'u32[]', space=smem, size = 0x4, offset = 0x4, fixed_abs, tag = 'smem constant byte address 0x4 - core index']
  #allocation1 [shape = 'u32[144,128]{1,0:T(1,128)}', space=vmem, size = 0x12000, scoped, tag = 'internal scratch']
  %s0 = inlined_call_operand.hbm [shape: f32[16,32], index: 0, kind: input, shape index: {}]
  %s1 = inlined_call_operand.hbm [shape: bf16[32,128], index: 1, kind: input, shape index: {}]
  %s2 = inlined_call_operand.vmem [shape: f32[1,128], index: 2, kind: input, shape index: {}]
  %s3 = inlined_call_operand.hbm [shape: bf16[128,128], index: 3, kind: input, shape index: {}]
  %s4 = inlined_call_operand.vmem [shape: f32[1,128], index: 4, kind: input, shape index: {}]
  %s5 = inlined_call_operand.hbm [shape: bf16[128,128], index: 5, kind: input, shape index: {}]
  %s6 = inlined_call_operand.vmem [shape: f32[1,128], index: 6, kind: input, shape index: {}]
  %s7 = inlined_call_operand.hbm [shape: f32[16,128], index: 7, kind: output, shape index: {}]
  %s8 = sld [smem:[#allocation0]]
  $region54: #{tpu_custom_call.1} parent=0
    _
  %s10 = ssub.s32 1, %s8
  %s11 = scalar_select 0, %s10, %s8
  $region1: #{tpu_custom_call.1} parent=0
    #allocation2 [shape = 'u8[8192]{0}', space=vmem, size = 0x2000, scoped, tag = 'input window, operand 0, single buffered']
    #allocation3 [shape = 's32[1]{0}', space=sflag, size = 0x4, scoped, tag = 'scoped memory for tpu_custom_call.1']
    #allocation4 [shape = 's32[1]{0}', space=sflag, size = 0x4, scoped, tag = 'scoped memory for tpu_custom_call.1']
    #allocation5 [shape = 'u8[8192]{0}', space=vmem, size = 0x2000, scoped, tag = 'input window, operand 1, single buffered']
    #allocation6 [shape = 's32[1]{0}', space=sflag, size = 0x4, scoped, tag = 'scoped memory for tpu_custom_call.1']
    #allocation7 [shape = 'u8[32768]{0}', space=vmem, size = 0x8000, scoped, tag = 'input window, operand 3, single buffered']
    #allocation8 [shape = 'u8[32768]{0}', space=vmem, size = 0x8000, scoped, tag = 'input window, operand 5, single buffered']
    #allocation9 [shape = 's32[1]{0}', space=sflag, size = 0x4, scoped, tag = 'scoped memory for tpu_custom_call.1']
    #allocation10 [shape = 'u8[8192]{0}', space=vmem, size = 0x2000, scoped, tag = 'output window, operand 0, single buffered']
    %12 = vsyncpa [#allocation3], 0
    %13 = vsyncpa [#allocation6], 0
    %14 = vsyncpa [#allocation9], 0
    %15 = vsyncpa [#allocation4], 0
    // Predicated region
    $region2: #{tpu_custom_call.1} parent=1 // pred_check
      _
    $region3: #{tpu_custom_call.1} parent=1 // pred_check_branch
      %17 = sbr.rel (0) target = $region5
    $region4: #{tpu_custom_call.1} parent=1 // pred_region
      %s19 = ssub.s32 256, 256
      %20 = vsyncadd [#allocation3], %s19
      %s21 = sshll.u32 [#allocation2], 4
      %s22 = int_to_ptr.vmem [resolvable:$true] %s21
      %27 = dma.hbm_to_vmem [thread:$0]  %s0, 256, %s22, [#allocation3], 128, 128, 8
    $region5: #{tpu_custom_call.1} parent=1 // pred_fallthru
      _
    // Predicated region
    $region6: #{tpu_custom_call.1} parent=1 // pred_check
      _
    $region7: #{tpu_custom_call.1} parent=1 // pred_check_branch
      %29 = sbr.rel (0) target = $region9
    $region8: #{tpu_custom_call.1} parent=1 // pred_region
      %s31 = ssub.s32 256, 256
      %32 = vsyncadd [#allocation6], %s31
      %s33 = sshll.u32 [#allocation5], 4
      %s34 = int_to_ptr.vmem [resolvable:$true] %s33
      %39 = dma.hbm_to_vmem [thread:$0]  %s1, 256, %s34, [#allocation6], 64, 64, 4
    $region9: #{tpu_custom_call.1} parent=1 // pred_fallthru
      _
    // Predicated region
    $region10: #{tpu_custom_call.1} parent=1 // pred_check
      _
    $region11: #{tpu_custom_call.1} parent=1 // pred_check_branch
      %41 = sbr.rel (0) target = $region13
    $region12: #{tpu_custom_call.1} parent=1 // pred_region
      _
    $region13: #{tpu_custom_call.1} parent=1 // pred_fallthru
      _
    // Predicated region
    $region14: #{tpu_custom_call.1} parent=1 // pred_check
      _
    $region15: #{tpu_custom_call.1} parent=1 // pred_check_branch
      %43 = sbr.rel (0) target = $region17
    $region16: #{tpu_custom_call.1} parent=1 // pred_region
      %s45 = ssub.s32 1024, 1024
      %46 = vsyncadd [#allocation6], %s45
      %s47 = sshll.u32 [#allocation7], 4
      %s48 = int_to_ptr.vmem [resolvable:$true] %s47
      %53 = dma.hbm_to_vmem [thread:$0]  %s3, 1024, %s48, [#allocation6], 64, 64, 4
    $region17: #{tpu_custom_call.1} parent=1 // pred_fallthru
      _
    // Predicated region
    $region18: #{tpu_custom_call.1} parent=1 // pred_check
      _
    $region19: #{tpu_custom_call.1} parent=1 // pred_check_branch
      %55 = sbr.rel (0) target = $region21
    $region20: #{tpu_custom_call.1} parent=1 // pred_region
      _
    $region21: #{tpu_custom_call.1} parent=1 // pred_fallthru
      _
    // Predicated region
    $region22: #{tpu_custom_call.1} parent=1 // pred_check
      _
    $region23: #{tpu_custom_call.1} parent=1 // pred_check_branch
      %57 = sbr.rel (0) target = $region25
    $region24: #{tpu_custom_call.1} parent=1 // pred_region
      %s59 = ssub.s32 1024, 1024
      %60 = vsyncadd [#allocation9], %s59
      %s61 = sshll.u32 [#allocation8], 4
      %s62 = int_to_ptr.vmem [resolvable:$true] %s61
      %67 = dma.hbm_to_vmem [thread:$0]  %s5, 1024, %s62, [#allocation9], 64, 64, 4
    $region25: #{tpu_custom_call.1} parent=1 // pred_fallthru
      _
    // Predicated region
    $region26: #{tpu_custom_call.1} parent=1 // pred_check
      _
    $region27: #{tpu_custom_call.1} parent=1 // pred_check_branch
      %69 = sbr.rel (0) target = $region29
    $region28: #{tpu_custom_call.1} parent=1 // pred_region
      _
    $region29: #{tpu_custom_call.1} parent=1 // pred_fallthru
      _
    // Predicated region
    $region30: #{tpu_custom_call.1} parent=1 // pred_check
      _
    $region31: #{tpu_custom_call.1} parent=1 // pred_check_branch
      %71 = sbr.rel (0) target = $region33
    $region32: #{tpu_custom_call.1} parent=1 // pred_region
      %72 = dma.done [#allocation3], 256
    $region33: #{tpu_custom_call.1} parent=1 // pred_fallthru
      _
    // Predicated region
    $region34: #{tpu_custom_call.1} parent=1 // pred_check
      _
    $region35: #{tpu_custom_call.1} parent=1 // pred_check_branch
      %74 = sbr.rel (0) target = $region37
    $region36: #{tpu_custom_call.1} parent=1 // pred_region
      %75 = dma.done [#allocation6], 256
    $region37: #{tpu_custom_call.1} parent=1 // pred_fallthru
      _
    // Predicated region
    $region38: #{tpu_custom_call.1} parent=1 // pred_check
      _
    $region39: #{tpu_custom_call.1} parent=1 // pred_check_branch
      %77 = sbr.rel (0) target = $region41
    $region40: #{tpu_custom_call.1} parent=1 // pred_region
      %78 = dma.done [#allocation6], 1024
    $region41: #{tpu_custom_call.1} parent=1 // pred_fallthru
      _
    // Predicated region
    $region42: #{tpu_custom_call.1} parent=1 // pred_check
      _
    $region43: #{tpu_custom_call.1} parent=1 // pred_check_branch
      %80 = sbr.rel (0) target = $region45
    $region44: #{tpu_custom_call.1} parent=1 // pred_region
      %81 = dma.done [#allocation9], 1024
    $region45: #{tpu_custom_call.1} parent=1 // pred_fallthru
      _
    %v83 = vld [vmem:[#allocation2] sm:$0xff]
    %v84 = vld [vmem:[#allocation2 + $0x8] sm:$0xff]
    %v85 = vpack.c.bf16 %v84, %v83
    %v86 = vld [vmem:[#allocation5] sm:$0xf]
    %v87 = vld [vmem:[#allocation5 + $0x4] sm:$0xf]
    %v88 = vld [vmem:[#allocation5 + $0x8] sm:$0xf]
    %v89 = vld [vmem:[#allocation5 + $0xc] sm:$0xf]
    %v90 = vld [vmem:[%s2] sm:$0x1]
    %v92 = vlaneseq
    %v93 = vshrl.u32 %v92, 7
    %v94 = vsub.s32 0, %v93
    %v95 = vrot.slane %v90, %v94
    %v101 = vunpack.c.l.b16 %v86
    %v102 = vunpack.c.l.b16 %v87
    %v103 = vunpack.c.l.b16 %v88
    %v104 = vunpack.c.l.b16 %v89
    %v105 = vpack.c.b16 %v102, %v101
    %v106 = vpack.c.b16 %v104, %v103
    %vm109 = vcmask 261120
    %v111 = vsel %vm109, %v85, 0
    %113 = vmatprep.subr.bf16.mxu0 0
    %114 = vmatpush1.bf16.msra.mxu0 %v105
    %115 = vmatprep.subr.bf16.mxu0 0
    %116 = vmatpush1.bf16.msra.mxu0 %v106
    %117 = vmatprep.subr.bf16.mxu0 0
    %118 = vmatpush1.bf16.msra.mxu0 0
    %119 = vmatprep.subr.bf16.mxu0 0
    %120 = vmatpush1.bf16.msra.mxu0 0
    %121 = vmatprep.subr.bf16.mxu0 0
    %122 = vmatpush1.bf16.msra.mxu0 0
    %123 = vmatprep.subr.bf16.mxu0 0
    %124 = vmatpush1.bf16.msra.mxu0 0
    %125 = vmatprep.subr.bf16.mxu0 0
    %126 = vmatpush1.bf16.msra.mxu0 0
    %127 = vmatprep.subr.bf16.mxu0 0
    %128 = vmatpush1.bf16.msra.mxu0 0
    %129 = vmatprep.subr.bf16.mxu0 0
    %130 = vmatpush1.bf16.msra.mxu0 0
    %131 = vmatprep.subr.bf16.mxu0 0
    %132 = vmatpush1.bf16.msra.mxu0 0
    %133 = vmatprep.subr.bf16.mxu0 0
    %134 = vmatpush1.bf16.msra.mxu0 0
    %135 = vmatprep.subr.bf16.mxu0 0
    %136 = vmatpush1.bf16.msra.mxu0 0
    %137 = vmatprep.subr.bf16.mxu0 0
    %138 = vmatpush1.bf16.msra.mxu0 0
    %139 = vmatprep.subr.bf16.mxu0 0
    %140 = vmatpush1.bf16.msra.mxu0 0
    %141 = vmatprep.subr.bf16.mxu0 0
    %142 = vmatpush1.bf16.msra.mxu0 0
    %143 = vmatprep.subr.bf16.mxu0 0
    %144 = vmatpush1.bf16.msra.mxu0 0
    %145 = vmatprep.mubr.bf16.mxu0 0
    %146 = vmatmul.mubr.bf16.gmra.mrb[0].mxu0 %v111
    %v147 = vpop.f32.mrb[0].mxu0
    %v148 = vadd.f32 %v95, %v147
    %v149 = vpop.f32.mrb[0].mxu0
    %v150 = vpop.f32.mrb[0].mxu0
    %v151 = vadd.f32 %v95, %v150
    %v152 = vpop.f32.mrb[0].mxu0
    %153 = vdwg.mxu0
    %v154 = vmax.f32 %v148, 0.0
    %v155 = vmax.f32 %v151, 0.0
    %v156 = vpack.c.bf16 %v155, %v154
    %v157 = vld [vmem:[#allocation7] sm:$0xf]
    %v158 = vld [vmem:[#allocation7 + $0x4] sm:$0xf]
    %v159 = vld [vmem:[#allocation7 + $0x8] sm:$0xf]
    %v160 = vld [vmem:[#allocation7 + $0xc] sm:$0xf]
    %v161 = vld [vmem:[#allocation7 + $0x10] sm:$0xf]
    %v162 = vld [vmem:[#allocation7 + $0x14] sm:$0xf]
    %v163 = vld [vmem:[#allocation7 + $0x18] sm:$0xf]
    %v164 = vld [vmem:[#allocation7 + $0x1c] sm:$0xf]
    %v165 = vld [vmem:[#allocation7 + $0x20] sm:$0xf]
    %v166 = vld [vmem:[#allocation7 + $0x24] sm:$0xf]
    %v167 = vld [vmem:[#allocation7 + $0x28] sm:$0xf]
    %v168 = vld [vmem:[#allocation7 + $0x2c] sm:$0xf]
    %v169 = vld [vmem:[#allocation7 + $0x30] sm:$0xf]
    %v170 = vld [vmem:[#allocation7 + $0x34] sm:$0xf]
    %v171 = vld [vmem:[#allocation7 + $0x38] sm:$0xf]
    %v172 = vld [vmem:[#allocation7 + $0x3c] sm:$0xf]
    %v173 = vld [vmem:[%s4] sm:$0x1]
    %v175 = vlaneseq
    %v176 = vshrl.u32 %v175, 7
    %v177 = vsub.s32 0, %v176
    %v178 = vrot.slane %v173, %v177
    %v196 = vunpack.c.l.b16 %v157
    %v197 = vunpack.c.l.b16 %v158
    %v198 = vunpack.c.l.b16 %v159
    %v199 = vunpack.c.l.b16 %v160
    %v200 = vunpack.c.l.b16 %v161
    %v201 = vunpack.c.l.b16 %v162
    %v202 = vunpack.c.l.b16 %v163
    %v203 = vunpack.c.l.b16 %v164
    %v204 = vunpack.c.l.b16 %v165
    %v205 = vunpack.c.l.b16 %v166
    %v206 = vunpack.c.l.b16 %v167
    %v207 = vunpack.c.l.b16 %v168
    %v208 = vunpack.c.l.b16 %v169
    %v209 = vunpack.c.l.b16 %v170
    %v210 = vunpack.c.l.b16 %v171
    %v211 = vunpack.c.l.b16 %v172
    %v212 = vpack.c.b16 %v197, %v196
    %v213 = vpack.c.b16 %v199, %v198
    %v214 = vpack.c.b16 %v201, %v200
    %v215 = vpack.c.b16 %v203, %v202
    %v216 = vpack.c.b16 %v205, %v204
    %v217 = vpack.c.b16 %v207, %v206
    %v218 = vpack.c.b16 %v209, %v208
    %v219 = vpack.c.b16 %v211, %v210
    %228 = vmatprep.subr.bf16.mxu0 0
    %229 = vmatpush1.bf16.msra.mxu0 %v212
    %230 = vmatprep.subr.bf16.mxu0 0
    %231 = vmatpush1.bf16.msra.mxu0 %v213
    %232 = vmatprep.subr.bf16.mxu0 0
    %233 = vmatpush1.bf16.msra.mxu0 %v214
    %234 = vmatprep.subr.bf16.mxu0 0
    %235 = vmatpush1.bf16.msra.mxu0 %v215
    %236 = vmatprep.subr.bf16.mxu0 0
    %237 = vmatpush1.bf16.msra.mxu0 %v216
    %238 = vmatprep.subr.bf16.mxu0 0
    %239 = vmatpush1.bf16.msra.mxu0 %v217
    %240 = vmatprep.subr.bf16.mxu0 0
    %241 = vmatpush1.bf16.msra.mxu0 %v218
    %242 = vmatprep.subr.bf16.mxu0 0
    %243 = vmatpush1.bf16.msra.mxu0 %v219
    %244 = vmatprep.subr.bf16.mxu0 0
    %245 = vmatpush1.bf16.msra.mxu0 0
    %246 = vmatprep.subr.bf16.mxu0 0
    %247 = vmatpush1.bf16.msra.mxu0 0
    %248 = vmatprep.subr.bf16.mxu0 0
    %249 = vmatpush1.bf16.msra.mxu0 0
    %250 = vmatprep.subr.bf16.mxu0 0
    %251 = vmatpush1.bf16.msra.mxu0 0
    %252 = vmatprep.subr.bf16.mxu0 0
    %253 = vmatpush1.bf16.msra.mxu0 0
    %254 = vmatprep.subr.bf16.mxu0 0
    %255 = vmatpush1.bf16.msra.mxu0 0
    %256 = vmatprep.subr.bf16.mxu0 0
    %257 = vmatpush1.bf16.msra.mxu0 0
    %258 = vmatprep.subr.bf16.mxu0 0
    %259 = vmatpush1.bf16.msra.mxu0 0
    %260 = vmatprep.mubr.bf16.mxu0 0
    %261 = vmatmul.mubr.bf16.gmra.mrb[0].mxu0 %v156
    %v262 = vpop.f32.mrb[0].mxu0
    %v263 = vadd.f32 %v178, %v262
    %v264 = vpop.f32.mrb[0].mxu0
    %v265 = vpop.f32.mrb[0].mxu0
    %v266 = vadd.f32 %v178, %v265
    %v267 = vpop.f32.mrb[0].mxu0
    %268 = vdwg.mxu0
    %v269 = vmax.f32 %v263, 0.0
    %v270 = vmax.f32 %v266, 0.0
    %v271 = vpack.c.bf16 %v270, %v269
    %v272 = vld [vmem:[#allocation8] sm:$0xf]
    %v273 = vld [vmem:[#allocation8 + $0x4] sm:$0xf]
    %v274 = vld [vmem:[#allocation8 + $0x8] sm:$0xf]
    %v275 = vld [vmem:[#allocation8 + $0xc] sm:$0xf]
    %v276 = vld [vmem:[#allocation8 + $0x10] sm:$0xf]
    %v277 = vld [vmem:[#allocation8 + $0x14] sm:$0xf]
    %v278 = vld [vmem:[#allocation8 + $0x18] sm:$0xf]
    %v279 = vld [vmem:[#allocation8 + $0x1c] sm:$0xf]
    %v280 = vld [vmem:[#allocation8 + $0x20] sm:$0xf]
    %v281 = vld [vmem:[#allocation8 + $0x24] sm:$0xf]
    %v282 = vld [vmem:[#allocation8 + $0x28] sm:$0xf]
    %v283 = vld [vmem:[#allocation8 + $0x2c] sm:$0xf]
    %v284 = vld [vmem:[#allocation8 + $0x30] sm:$0xf]
    %v285 = vld [vmem:[#allocation8 + $0x34] sm:$0xf]
    %v286 = vld [vmem:[#allocation8 + $0x38] sm:$0xf]
    %v287 = vld [vmem:[#allocation8 + $0x3c] sm:$0xf]
    %v288 = vld [vmem:[%s6] sm:$0x1]
    %v290 = vlaneseq
    %v291 = vshrl.u32 %v290, 7
    %v292 = vsub.s32 0, %v291
    %v293 = vrot.slane %v288, %v292
    %v311 = vunpack.c.l.b16 %v272
    %v312 = vunpack.c.l.b16 %v273
    %v313 = vunpack.c.l.b16 %v274
    %v314 = vunpack.c.l.b16 %v275
    %v315 = vunpack.c.l.b16 %v276
    %v316 = vunpack.c.l.b16 %v277
    %v317 = vunpack.c.l.b16 %v278
    %v318 = vunpack.c.l.b16 %v279
    %v319 = vunpack.c.l.b16 %v280
    %v320 = vunpack.c.l.b16 %v281
    %v321 = vunpack.c.l.b16 %v282
    %v322 = vunpack.c.l.b16 %v283
    %v323 = vunpack.c.l.b16 %v284
    %v324 = vunpack.c.l.b16 %v285
    %v325 = vunpack.c.l.b16 %v286
    %v326 = vunpack.c.l.b16 %v287
    %v327 = vpack.c.b16 %v312, %v311
    %v328 = vpack.c.b16 %v314, %v313
    %v329 = vpack.c.b16 %v316, %v315
    %v330 = vpack.c.b16 %v318, %v317
    %v331 = vpack.c.b16 %v320, %v319
    %v332 = vpack.c.b16 %v322, %v321
    %v333 = vpack.c.b16 %v324, %v323
    %v334 = vpack.c.b16 %v326, %v325
    %343 = vmatprep.subr.bf16.mxu0 0
    %344 = vmatpush1.bf16.msra.mxu0 %v327
    %345 = vmatprep.subr.bf16.mxu0 0
    %346 = vmatpush1.bf16.msra.mxu0 %v328
    %347 = vmatprep.subr.bf16.mxu0 0
    %348 = vmatpush1.bf16.msra.mxu0 %v329
    %349 = vmatprep.subr.bf16.mxu0 0
    %350 = vmatpush1.bf16.msra.mxu0 %v330
    %351 = vmatprep.subr.bf16.mxu0 0
    %352 = vmatpush1.bf16.msra.mxu0 %v331
    %353 = vmatprep.subr.bf16.mxu0 0
    %354 = vmatpush1.bf16.msra.mxu0 %v332
    %355 = vmatprep.subr.bf16.mxu0 0
    %356 = vmatpush1.bf16.msra.mxu0 %v333
    %357 = vmatprep.subr.bf16.mxu0 0
    %358 = vmatpush1.bf16.msra.mxu0 %v334
    %359 = vmatprep.subr.bf16.mxu0 0
    %360 = vmatpush1.bf16.msra.mxu0 0
    %361 = vmatprep.subr.bf16.mxu0 0
    %362 = vmatpush1.bf16.msra.mxu0 0
    %363 = vmatprep.subr.bf16.mxu0 0
    %364 = vmatpush1.bf16.msra.mxu0 0
    %365 = vmatprep.subr.bf16.mxu0 0
    %366 = vmatpush1.bf16.msra.mxu0 0
    %367 = vmatprep.subr.bf16.mxu0 0
    %368 = vmatpush1.bf16.msra.mxu0 0
    %369 = vmatprep.subr.bf16.mxu0 0
    %370 = vmatpush1.bf16.msra.mxu0 0
    %371 = vmatprep.subr.bf16.mxu0 0
    %372 = vmatpush1.bf16.msra.mxu0 0
    %373 = vmatprep.subr.bf16.mxu0 0
    %374 = vmatpush1.bf16.msra.mxu0 0
    %375 = vmatprep.mubr.bf16.mxu0 0
    %376 = vmatmul.mubr.bf16.gmra.mrb[0].mxu0 %v271
    %v377 = vpop.f32.mrb[0].mxu0
    %v378 = vadd.f32 %v293, %v377
    %v379 = vpop.f32.mrb[0].mxu0
    %v380 = vpop.f32.mrb[0].mxu0
    %v381 = vadd.f32 %v293, %v380
    %v382 = vpop.f32.mrb[0].mxu0
    %383 = vdwg.mxu0
    %384 = vst [vmem:[#allocation10] sm:$0xff] %v378
    %385 = vst [vmem:[#allocation10 + $0x8] sm:$0xff] %v381
    // Predicated region
    $region46: #{tpu_custom_call.1} parent=1 // pred_check
      _
    $region47: #{tpu_custom_call.1} parent=1 // pred_check_branch
      %387 = sbr.rel (0) target = $region49
    $region48: #{tpu_custom_call.1} parent=1 // pred_region
      %s389 = ssub.s32 256, 256
      %390 = vsyncadd [#allocation4], %s389
      %s391 = sshll.u32 [#allocation10], 4
      %s392 = int_to_ptr.vmem [resolvable:$true] %s391
      %397 = dma.vmem_to_hbm [thread:$0]  %s392, 256, %s7, [#allocation4], 128, 128, 8
    $region49: #{tpu_custom_call.1} parent=1 // pred_fallthru
      _
    // Predicated region
    $region50: #{tpu_custom_call.1} parent=1 // pred_check
      _
    $region51: #{tpu_custom_call.1} parent=1 // pred_check_branch
      %399 = sbr.rel (0) target = $region53
    $region52: #{tpu_custom_call.1} parent=1 // pred_region
      %400 = dma.done [#allocation4], 256
    $region53: #{tpu_custom_call.1} parent=1 // pred_fallthru
      _
    %401 = vsyncpa [#allocation3], 1
    %402 = vsyncpa [#allocation6], 1
    %403 = vsyncpa [#allocation9], 1
    %404 = vsyncpa [#allocation4], 1

</llo_original>
